<compile_context>
chip_gen: v7x
topology: tpu7x:2x2x1
jax: 0.10.0
libtpu: 0.0.40
codegen_flags: <defaults>
</compile_context>

<pallas_src>
import functools

import numpy as np
import jax
import jax.numpy as jnp
from jax.experimental import pallas as pl
from jax.experimental.pallas import tpu as pltpu


def _robustprompt_kernel(p_nz_ref, x_ref, at_ref, prompts_ref, xnew_ref, stats_ref,
                         *, sim_thr, deg_thr, tn_rows):
    # ---- full-graph features: needed as the matmul contraction operand ----
    x_full = x_ref[...].astype(jnp.float32)                       # [Gb, N, C]
    gb, n, c_dim = x_full.shape

    # torch: x / sqrt(sum(x*x)); zero rows -> NaN (0 * inf), preserved.
    xsq_full = jnp.sum(x_full * x_full, axis=-1, keepdims=True)
    xn_full = x_full * jax.lax.rsqrt(xsq_full)                    # [Gb, N, C]

    # Append a ones column so one MXU pass also emits node degrees (deg = AT @ 1).
    # bf16 in / f32 accumulation -> integer degrees are exact.
    xn_aug = jnp.concatenate(
        [xn_full.astype(jnp.bfloat16), jnp.ones((gb, n, 1), jnp.bfloat16)], axis=-1)

    # int8 adjacency rows for this output tile; upcast to bf16 in VMEM (never int8 -> MXU).
    at = at_ref[...].astype(jnp.bfloat16)                         # [Gb, TN, N]

    agg_aug = jnp.einsum('gji,gic->gjc', at, xn_aug,
                         preferred_element_type=jnp.float32)      # [Gb, TN, C+1]
    agg = agg_aug[..., :c_dim]                                    # AT @ x_norm
    deg = agg_aug[..., c_dim:c_dim + 1]                           # rowsum(AT) == degree(col, N)

    # ---- rows owned by this grid step ----
    row0 = pl.multiple_of(pl.program_id(1) * tn_rows, tn_rows)
    x_tile = x_ref[:, pl.ds(row0, tn_rows), :].astype(jnp.float32)   # [Gb, TN, C]
    xsq_t = jnp.sum(x_tile * x_tile, axis=-1, keepdims=True)
    xn_tile = x_tile * jax.lax.rsqrt(xsq_t)

    # c_j = xn_j . (AT @ xn)_j  ==  rowsum(AT * (xn @ xn^T))_j  (scatter_add_(index=col, src=e))
    c = jnp.sum(xn_tile * agg, axis=-1, keepdims=True)            # [Gb, TN, 1]
    csim = c / deg                                                # NaN for deg==0 (matches torch)

    sim_mask = (csim <= sim_thr).astype(jnp.float32)              # [Gb, TN, 1]
    deg_mask = (deg <= deg_thr).astype(jnp.float32)
    other_mask = 1.0 - jnp.maximum(sim_mask, deg_mask)            # 'other_pt' == 'all'

    prompts = prompts_ref[...].astype(jnp.float32)                # [3, C]
    p_sim, p_deg, p_other = prompts[0:1, :], prompts[1:2, :], prompts[2:3, :]
    # g_mutiftpt_record.sum(dim=1): every written slot contributes its prompt row
    rec_sum = sim_mask * p_sim + deg_mask * p_deg + other_mask * p_other   # [Gb, TN, C]

    # wo_padding_mask slot count: slot counts iff every element of (mask*prompt) is nonzero,
    # i.e. per-prompt all-nonzero scalars, precomputed in the wrapper (SMEM scalar prefetch).
    pnz_sim = p_nz_ref[0].astype(jnp.float32)
    pnz_deg = p_nz_ref[1].astype(jnp.float32)
    pnz_other = p_nz_ref[2].astype(jnp.float32)
    cnt = sim_mask * pnz_sim + deg_mask * pnz_deg + other_mask * pnz_other  # [Gb, TN, 1]

    # final = where(cnt != 0, rec_sum / cnt, 0), without generating inf/NaN
    inv_cnt = 1.0 / jnp.maximum(cnt, 1.0)
    final = jnp.where(cnt != 0.0, rec_sum, 0.0) * inv_cnt
    x_new = x_tile + final                                        # g.x = add_pt(g.x, final)
    xnew_ref[...] = x_new

    # per-node inverse L2 norm of prompted features (edge-pruning cosine done in glue)
    ssq = jnp.sum(x_new * x_new, axis=-1, keepdims=True)
    inv_nrm = jax.lax.rsqrt(jnp.maximum(ssq, 1e-16))   # ~ F.cosine_similarity eps clamp

    # stats lanes: 0 = csim, 1 = deg, 2 = 1/||x_new||  (direct slice stores, no pad/concat copy)
    stats_ref[:, :, 0:1] = csim
    stats_ref[:, :, 1:2] = deg
    stats_ref[:, :, 2:3] = inv_nrm


def robust_prompt_forward(x, at_int8, prompts, *, sim_thr, deg_thr,
                          graphs_per_block=1, row_tile=None):
    G, N, C = x.shape
    Gb = graphs_per_block
    assert G % Gb == 0, "graphs_per_block must divide the number of graphs"
    if row_tile is None:
        # Row-tile the adjacency for large graphs; keep blocks whole for small ones.
        row_tile = N if N <= 512 else 512
    TN = row_tile
    assert N % TN == 0 and (TN == N or TN % 8 == 0), "row_tile must divide N (multiple of 8)"

    # Hoisted out of the kernel (loop-invariant): prompt rows that are fully nonzero.
    p_nz = jnp.all(prompts != 0.0, axis=-1).astype(jnp.int32)     # (3,)

    kernel = functools.partial(_robustprompt_kernel, sim_thr=float(sim_thr),
                               deg_thr=float(deg_thr), tn_rows=TN)
    return pl.pallas_call(
        kernel,
        out_shape=(
            jax.ShapeDtypeStruct((G, N, C), jnp.float32),   # prompted node features (g.x)
            jax.ShapeDtypeStruct((G, N, 3), jnp.float32),   # per-node (csim, deg, 1/||x_new||)
        ),
        grid_spec=pltpu.PrefetchScalarGridSpec(
            num_scalar_prefetch=1,
            grid=(G // Gb, N // TN),
            in_specs=[
                pl.BlockSpec((Gb, N, C), lambda g, j, pnz: (g, 0, 0)),   # full x (contraction dim)
                pl.BlockSpec((Gb, TN, N), lambda g, j, pnz: (g, j, 0)),  # row-tiled int8 adjacency
                pl.BlockSpec((3, C), lambda g, j, pnz: (0, 0)),
            ],
            out_specs=(
                pl.BlockSpec((Gb, TN, C), lambda g, j, pnz: (g, j, 0)),
                pl.BlockSpec((Gb, TN, 3), lambda g, j, pnz: (g, j, 0)),
            ),
        ),
        compiler_params=pltpu.CompilerParams(
            dimension_semantics=("parallel", "parallel"),
            # 48 MiB: leaves headroom on v7x (64 MiB physical); conservative on v5e/v6e (128 MiB).
            vmem_limit_bytes=48 * 1024 * 1024),
    )(p_nz, x, at_int8, prompts)


def glorot(key, shape):
    fan_in, fan_out = shape[-2], shape[-1]
    a = np.sqrt(6.0 / (fan_in + fan_out))
    return jax.random.uniform(key, shape, jnp.float32, minval=-a, maxval=a)


if __name__ == "__main__":
    G, N, C = 2, 16, 32                      # 2 graphs, 16 nodes each, in_channels=32
    SIM_THR, DEG_THR, PT_THRESHOLD = 0.3, 2.0, 0.1

    key = jax.random.PRNGKey(0)
    k_x, k_sim, k_deg, k_other = jax.random.split(key, 4)

    # node features
    x = jax.random.normal(k_x, (G, N, C), jnp.float32)

    # deterministic edge_index (same topology per graph): bidirectional ring + one chord
    edges = []
    for i in range(N):
        edges.append((i, (i + 1) % N))
        edges.append(((i + 1) % N, i))
    edges.append((0, N // 2))
    edges.append((N // 2, 0))
    edge_index = np.array(edges, dtype=np.int32).T          # [2, E]

    # dense transposed adjacency as int8: AT[j, i] = #edges i->j (exact for counts <= 127)
    at = np.zeros((G, N, N), np.int8)
    for g in range(G):
        np.add.at(at[g], (edge_index[1], edge_index[0]), 1)
    at = jnp.asarray(at)                                     # int8

    # prompt parameters (glorot init, like reset_parameters)
    prompt_sim_pt = glorot(k_sim, (1, C))
    prompt_degree_pt = glorot(k_deg, (1, C))
    prompt_other_pt = glorot(k_other, (1, C))
    prompts = jnp.concatenate([prompt_sim_pt, prompt_degree_pt, prompt_other_pt], axis=0)

    x_new, stats = robust_prompt_forward(
        x, at, prompts, sim_thr=SIM_THR, deg_thr=DEG_THR, graphs_per_block=1)
    jax.block_until_ready((x_new, stats))

    # host-side glue: edge pruning (keep edges whose endpoint cosine sim >= threshold)
    # and the node_use_each_pt_whole_batch bookkeeping dict (data-dependent sizes).
    x_new_np = np.asarray(x_new)
    stats_np = np.asarray(stats)
    src, dst = edge_index[0], edge_index[1]
    node_use_each_pt = {'sim_pt': [], 'degree_pt': [], 'other_pt': [], 'g_start_index': []}
    pruned_graphs = []
    start = 0
    with np.errstate(invalid='ignore'):          # NaN csim (deg==0) compares False, as in torch
        for g in range(G):
            csim_g = stats_np[g, :, 0]
            deg_g = stats_np[g, :, 1]
            inv_nrm_g = stats_np[g, :, 2]
            # per-edge cosine similarity of prompted features (F.cosine_similarity)
            per_edge_cos = (np.sum(x_new_np[g, src] * x_new_np[g, dst], axis=-1)
                            * inv_nrm_g[src] * inv_nrm_g[dst])
            keep = per_edge_cos >= PT_THRESHOLD
            pruned_graphs.append((x_new_np[g], edge_index[:, keep]))

            sim_mask = csim_g <= SIM_THR
            deg_mask = deg_g <= DEG_THR
            other_mask = ~(sim_mask | deg_mask)
            node_use_each_pt['sim_pt'].append(np.nonzero(sim_mask)[0] + start)
            node_use_each_pt['degree_pt'].append(np.nonzero(deg_mask)[0] + start)
            node_use_each_pt['other_pt'].append(np.nonzero(other_mask)[0] + start)
            node_use_each_pt['g_start_index'].append(start)
            start += N

    print("KERNEL_OK")
</pallas_src>

<mosaic_0001>
module attributes {stable_mosaic.version = 11 : i64} {
  func.func @_robustprompt_kernel(%arg0: i32, %arg1: i32, %arg2: memref<3xi32, #tpu.memory_space<smem>>, %arg3: memref<1x16x32xf32, #tpu.memory_space<vmem>>, %arg4: memref<1x16x16xi8, #tpu.memory_space<vmem>>, %arg5: memref<3x32xf32, #tpu.memory_space<vmem>>, %arg6: memref<1x16x32xf32, #tpu.memory_space<vmem>>, %arg7: memref<1x16x3xf32, #tpu.memory_space<vmem>>) attributes {dimension_semantics = [#tpu.dimension_semantics<parallel>, #tpu.dimension_semantics<parallel>], iteration_bounds = array<i64: 2, 1>, scalar_prefetch = 1 : i64, scratch_operands = 0 : i64, tpu.core_type = #tpu.core_type<tc>, window_params = [{transform_indices = @transform_0, window_bounds = array<i64: 1, 16, 32>}, {transform_indices = @transform_1, window_bounds = array<i64: 1, 16, 16>}, {pipeline_mode = #tpu.pipeline_mode<synchronous>, transform_indices = @transform_2, window_bounds = array<i64: 3, 32>}, {transform_indices = @transform_3, window_bounds = array<i64: 1, 16, 32>}, {transform_indices = @transform_4, window_bounds = array<i64: 1, 16, 3>}]} {
    %c0 = arith.constant 0 : index
    %c0_0 = arith.constant 0 : index
    %c0_1 = arith.constant 0 : index
    %0 = vector.load %arg3[%c0, %c0_0, %c0_1] : memref<1x16x32xf32, #tpu.memory_space<vmem>>, vector<1x16x32xf32>
    %1 = arith.mulf %0, %0 : vector<1x16x32xf32>
    %cst = arith.constant dense<0.000000e+00> : vector<1x16xf32>
    %2 = vector.multi_reduction <add>, %1, %cst [2] : vector<1x16x32xf32> to vector<1x16xf32>
    %3 = vector.shape_cast %2 : vector<1x16xf32> to vector<1x16x1xf32>
    %4 = math.rsqrt %3 : vector<1x16x1xf32>
    %5 = vector.broadcast %4 : vector<1x16x1xf32> to vector<1x16x32xf32>
    %6 = arith.mulf %0, %5 : vector<1x16x32xf32>
    %7 = arith.truncf %6 : vector<1x16x32xf32> to vector<1x16x32xbf16>
    %cst_2 = arith.constant 1.000000e+00 : bf16
    %8 = vector.broadcast %cst_2 : bf16 to vector<1x16x1xbf16>
    %9 = tpu.concatenate %7, %8 in 2 : vector<1x16x32xbf16>, vector<1x16x1xbf16> -> vector<1x16x33xbf16>
    %c0_3 = arith.constant 0 : index
    %c0_4 = arith.constant 0 : index
    %c0_5 = arith.constant 0 : index
    %10 = vector.load %arg4[%c0_3, %c0_4, %c0_5] : memref<1x16x16xi8, #tpu.memory_space<vmem>>, vector<1x16x16xi8>
    %11 = arith.sitofp %10 : vector<1x16x16xi8> to vector<1x16x16xbf16>
    "tpu.trace_start"() <{level = 10 : i32, message = "gji,gic->gjc"}> : () -> ()
    %cst_6 = arith.constant dense<0.000000e+00> : vector<1x16x33xf32>
    %12 = tpu.matmul %11, %9, %cst_6 {dimension_numbers = #tpu.dot_dimension_numbers<[2], [1], [1], [2], [0, 0, 0, 1, 1, 2], [0], [0]>} : vector<1x16x16xbf16>, vector<1x16x33xbf16>, vector<1x16x33xf32> -> vector<1x16x33xf32>
    "tpu.trace_stop"() : () -> ()
    %13 = vector.extract_strided_slice %12 {offsets = [0, 0, 0], sizes = [1, 16, 32], strides = [1, 1, 1]} : vector<1x16x33xf32> to vector<1x16x32xf32>
    %14 = vector.extract_strided_slice %12 {offsets = [0, 0, 32], sizes = [1, 16, 1], strides = [1, 1, 1]} : vector<1x16x33xf32> to vector<1x16x1xf32>
    %c16_i32 = arith.constant 16 : i32
    %15 = arith.muli %arg1, %c16_i32 : i32
    %16 = tpu.assume_multiple %15, 16 : i32
    %c0_7 = arith.constant 0 : index
    %17 = arith.index_cast %16 : i32 to index
    %c0_8 = arith.constant 0 : index
    %18 = vector.load %arg3[%c0_7, %17, %c0_8] : memref<1x16x32xf32, #tpu.memory_space<vmem>>, vector<1x16x32xf32>
    %19 = arith.mulf %18, %18 : vector<1x16x32xf32>
    %cst_9 = arith.constant dense<0.000000e+00> : vector<1x16xf32>
    %20 = vector.multi_reduction <add>, %19, %cst_9 [2] : vector<1x16x32xf32> to vector<1x16xf32>
    %21 = vector.shape_cast %20 : vector<1x16xf32> to vector<1x16x1xf32>
    %22 = math.rsqrt %21 : vector<1x16x1xf32>
    %23 = vector.broadcast %22 : vector<1x16x1xf32> to vector<1x16x32xf32>
    %24 = arith.mulf %18, %23 : vector<1x16x32xf32>
    %25 = arith.mulf %24, %13 : vector<1x16x32xf32>
    %cst_10 = arith.constant dense<0.000000e+00> : vector<1x16xf32>
    %26 = vector.multi_reduction <add>, %25, %cst_10 [2] : vector<1x16x32xf32> to vector<1x16xf32>
    %27 = vector.shape_cast %26 : vector<1x16xf32> to vector<1x16x1xf32>
    %28 = arith.divf %27, %14 : vector<1x16x1xf32>
    %cst_11 = arith.constant 3.000000e-01 : f32
    %29 = vector.broadcast %cst_11 : f32 to vector<1x16x1xf32>
    %30 = arith.cmpf ole, %28, %29 : vector<1x16x1xf32>
    %31 = arith.extui %30 : vector<1x16x1xi1> to vector<1x16x1xi32>
    %32 = arith.sitofp %31 : vector<1x16x1xi32> to vector<1x16x1xf32>
    %cst_12 = arith.constant 2.000000e+00 : f32
    %33 = vector.broadcast %cst_12 : f32 to vector<1x16x1xf32>
    %34 = arith.cmpf ole, %14, %33 : vector<1x16x1xf32>
    %35 = arith.extui %34 : vector<1x16x1xi1> to vector<1x16x1xi32>
    %36 = arith.sitofp %35 : vector<1x16x1xi32> to vector<1x16x1xf32>
    %37 = arith.maximumf %32, %36 : vector<1x16x1xf32>
    %cst_13 = arith.constant 1.000000e+00 : f32
    %38 = vector.broadcast %cst_13 : f32 to vector<1x16x1xf32>
    %39 = arith.subf %38, %37 : vector<1x16x1xf32>
    %c0_14 = arith.constant 0 : index
    %c0_15 = arith.constant 0 : index
    %40 = vector.load %arg5[%c0_14, %c0_15] : memref<3x32xf32, #tpu.memory_space<vmem>>, vector<3x32xf32>
    %41 = vector.extract_strided_slice %40 {offsets = [0, 0], sizes = [1, 32], strides = [1, 1]} : vector<3x32xf32> to vector<1x32xf32>
    %42 = vector.extract_strided_slice %40 {offsets = [1, 0], sizes = [1, 32], strides = [1, 1]} : vector<3x32xf32> to vector<1x32xf32>
    %43 = vector.extract_strided_slice %40 {offsets = [2, 0], sizes = [1, 32], strides = [1, 1]} : vector<3x32xf32> to vector<1x32xf32>
    %44 = vector.shape_cast %41 : vector<1x32xf32> to vector<1x1x32xf32>
    %45 = vector.broadcast %32 : vector<1x16x1xf32> to vector<1x16x32xf32>
    %46 = vector.broadcast %44 : vector<1x1x32xf32> to vector<1x16x32xf32>
    %47 = arith.mulf %45, %46 : vector<1x16x32xf32>
    %48 = vector.shape_cast %42 : vector<1x32xf32> to vector<1x1x32xf32>
    %49 = vector.broadcast %36 : vector<1x16x1xf32> to vector<1x16x32xf32>
    %50 = vector.broadcast %48 : vector<1x1x32xf32> to vector<1x16x32xf32>
    %51 = arith.mulf %49, %50 : vector<1x16x32xf32>
    %52 = arith.addf %47, %51 : vector<1x16x32xf32>
    %53 = vector.shape_cast %43 : vector<1x32xf32> to vector<1x1x32xf32>
    %54 = vector.broadcast %39 : vector<1x16x1xf32> to vector<1x16x32xf32>
    %55 = vector.broadcast %53 : vector<1x1x32xf32> to vector<1x16x32xf32>
    %56 = arith.mulf %54, %55 : vector<1x16x32xf32>
    %57 = arith.addf %52, %56 : vector<1x16x32xf32>
    %c0_16 = arith.constant 0 : index
    %58 = memref.load %arg2[%c0_16] : memref<3xi32, #tpu.memory_space<smem>>
    %59 = arith.sitofp %58 : i32 to f32
    %c1 = arith.constant 1 : index
    %60 = memref.load %arg2[%c1] : memref<3xi32, #tpu.memory_space<smem>>
    %61 = arith.sitofp %60 : i32 to f32
    %c2 = arith.constant 2 : index
    %62 = memref.load %arg2[%c2] : memref<3xi32, #tpu.memory_space<smem>>
    %63 = arith.sitofp %62 : i32 to f32
    %64 = vector.broadcast %59 : f32 to vector<1x16x1xf32>
    %65 = arith.mulf %32, %64 : vector<1x16x1xf32>
    %66 = vector.broadcast %61 : f32 to vector<1x16x1xf32>
    %67 = arith.mulf %36, %66 : vector<1x16x1xf32>
    %68 = arith.addf %65, %67 : vector<1x16x1xf32>
    %69 = vector.broadcast %63 : f32 to vector<1x16x1xf32>
    %70 = arith.mulf %39, %69 : vector<1x16x1xf32>
    %71 = arith.addf %68, %70 : vector<1x16x1xf32>
    %cst_17 = arith.constant 1.000000e+00 : f32
    %72 = vector.broadcast %cst_17 : f32 to vector<1x16x1xf32>
    %73 = arith.maximumf %71, %72 : vector<1x16x1xf32>
    %cst_18 = arith.constant 1.000000e+00 : f32
    %74 = vector.broadcast %cst_18 : f32 to vector<1x16x1xf32>
    %75 = arith.divf %74, %73 : vector<1x16x1xf32>
    %cst_19 = arith.constant 0.000000e+00 : f32
    %76 = vector.broadcast %cst_19 : f32 to vector<1x16x1xf32>
    %77 = arith.cmpf one, %71, %76 : vector<1x16x1xf32>
    %cst_20 = arith.constant 0.000000e+00 : f32
    %78 = vector.shape_cast %77 : vector<1x16x1xi1> to vector<1x16x1xi1>
    %79 = vector.broadcast %78 : vector<1x16x1xi1> to vector<1x16x32xi1>
    %80 = vector.broadcast %cst_20 : f32 to vector<1x16x32xf32>
    %81 = arith.select %79, %57, %80 : vector<1x16x32xi1>, vector<1x16x32xf32>
    %82 = vector.broadcast %75 : vector<1x16x1xf32> to vector<1x16x32xf32>
    %83 = arith.mulf %81, %82 : vector<1x16x32xf32>
    %84 = arith.addf %18, %83 : vector<1x16x32xf32>
    %c0_21 = arith.constant 0 : index
    %c0_22 = arith.constant 0 : index
    %c0_23 = arith.constant 0 : index
    %85 = vector.load %arg6[%c0_21, %c0_22, %c0_23] : memref<1x16x32xf32, #tpu.memory_space<vmem>>, vector<1x16x32xf32>
    tpu.vector_store %arg6[%c0_21, %c0_22, %c0_23], %84 {strides = array<i32>} : memref<1x16x32xf32, #tpu.memory_space<vmem>>, vector<1x16x32xf32>,
    %86 = arith.mulf %84, %84 : vector<1x16x32xf32>
    %cst_24 = arith.constant dense<0.000000e+00> : vector<1x16xf32>
    %87 = vector.multi_reduction <add>, %86, %cst_24 [2] : vector<1x16x32xf32> to vector<1x16xf32>
    %88 = vector.shape_cast %87 : vector<1x16xf32> to vector<1x16x1xf32>
    %cst_25 = arith.constant 1.000000e-16 : f32
    %89 = vector.broadcast %cst_25 : f32 to vector<1x16x1xf32>
    %90 = arith.maximumf %88, %89 : vector<1x16x1xf32>
    %91 = math.rsqrt %90 : vector<1x16x1xf32>
    %c0_26 = arith.constant 0 : index
    %c0_27 = arith.constant 0 : index
    %c0_28 = arith.constant 0 : index
    %92 = vector.load %arg7[%c0_26, %c0_27, %c0_28] : memref<1x16x3xf32, #tpu.memory_space<vmem>>, vector<1x16x1xf32>
    tpu.vector_store %arg7[%c0_26, %c0_27, %c0_28], %28 {strides = array<i32>} : memref<1x16x3xf32, #tpu.memory_space<vmem>>, vector<1x16x1xf32>,
    %c0_29 = arith.constant 0 : index
    %c0_30 = arith.constant 0 : index
    %c1_31 = arith.constant 1 : index
    %93 = vector.load %arg7[%c0_29, %c0_30, %c1_31] : memref<1x16x3xf32, #tpu.memory_space<vmem>>, vector<1x16x1xf32>
    tpu.vector_store %arg7[%c0_29, %c0_30, %c1_31], %14 {strides = array<i32>} : memref<1x16x3xf32, #tpu.memory_space<vmem>>, vector<1x16x1xf32>,
    %c0_32 = arith.constant 0 : index
    %c0_33 = arith.constant 0 : index
    %c2_34 = arith.constant 2 : index
    %94 = vector.load %arg7[%c0_32, %c0_33, %c2_34] : memref<1x16x3xf32, #tpu.memory_space<vmem>>, vector<1x16x1xf32>
    tpu.vector_store %arg7[%c0_32, %c0_33, %c2_34], %91 {strides = array<i32>} : memref<1x16x3xf32, #tpu.memory_space<vmem>>, vector<1x16x1xf32>,
    return
  }
  func.func @transform_0(%arg0: i32, %arg1: i32, %arg2: memref<3xi32, #tpu.memory_space<smem>>) -> (i32, i32, i32) {
    %c0_i32 = arith.constant 0 : i32
    %c0_i32_0 = arith.constant 0 : i32
    %c0_i32_1 = arith.constant 0 : i32
    return %arg0, %c0_i32, %c0_i32_0 : i32, i32, i32
  }
  func.func @transform_1(%arg0: i32, %arg1: i32, %arg2: memref<3xi32, #tpu.memory_space<smem>>) -> (i32, i32, i32) {
    %c0_i32 = arith.constant 0 : i32
    %c0_i32_0 = arith.constant 0 : i32
    return %arg0, %arg1, %c0_i32 : i32, i32, i32
  }
  func.func @transform_2(%arg0: i32, %arg1: i32, %arg2: memref<3xi32, #tpu.memory_space<smem>>) -> (i32, i32) {
    %c0_i32 = arith.constant 0 : i32
    %c0_i32_0 = arith.constant 0 : i32
    %c0_i32_1 = arith.constant 0 : i32
    return %c0_i32, %c0_i32_0 : i32, i32
  }
  func.func @transform_3(%arg0: i32, %arg1: i32, %arg2: memref<3xi32, #tpu.memory_space<smem>>) -> (i32, i32, i32) {
    %c0_i32 = arith.constant 0 : i32
    %c0_i32_0 = arith.constant 0 : i32
    return %arg0, %arg1, %c0_i32 : i32, i32, i32
  }
  func.func @transform_4(%arg0: i32, %arg1: i32, %arg2: memref<3xi32, #tpu.memory_space<smem>>) -> (i32, i32, i32) {
    %c0_i32 = arith.constant 0 : i32
    %c0_i32_0 = arith.constant 0 : i32
    return %arg0, %arg1, %c0_i32 : i32, i32, i32
  }
}

</mosaic_0001>

<llo_original>
// kernel: tpu_custom_call.1
$region0: #{tpu_custom_call.1}
  #allocation0 [shape = 'u32[]', space=smem, size = 0x4, offset = 0x4, fixed_abs, tag = 'smem constant byte address 0x4 - core index']
  #allocation1 [shape = 'u32[144,128]{1,0:T(1,128)}', space=vmem, size = 0x12000, scoped, tag = 'internal scratch']
  #allocation2 [shape = 's32[1]{0}', space=sflag, size = 0x4, scoped, tag = 'scoped memory for tpu_custom_call.1']
  #allocation3 [shape = 'u8[512]{0}', space=smem, size = 0x200, scoped, tag = 'prefetched SMEM operand 0']
  %s0 = inlined_call_operand.hbm [shape: s32[3], index: 0, kind: input, shape index: {}]
  %s1 = inlined_call_operand.hbm [shape: f32[2,16,32], index: 1, kind: input, shape index: {}]
  %s2 = inlined_call_operand.hbm [shape: s8[2,16,16], index: 2, kind: input, shape index: {}]
  %s3 = inlined_call_operand.vmem [shape: f32[3,32], index: 3, kind: input, shape index: {}]
  %s4 = inlined_call_operand.hbm [shape: f32[2,16,32], index: 4, kind: output, shape index: {0}]
  %s5 = inlined_call_operand.vmem [shape: f32[2,16,3], index: 5, kind: output, shape index: {1}]
  %6 = xla_tuple %s4, %s5
  %s7 = sld [smem:[#allocation0]]
  $region61: #{tpu_custom_call.1} parent=0
    _
  %s9 = ssub.s32 1, %s7
  %s10 = scalar_select 0, %s9, %s7
  %12 = dma.hbm_to_smem %s0, 16, [#allocation3], [#allocation2]
  %13 = dma.done [#allocation2], 16
  %14 = sfence
  $region1: #{tpu_custom_call.1} parent=0
    #allocation4 [shape = 'u8[16384]{0}', space=vmem, size = 0x4000, scoped, tag = 'input window, operand 1']
    #allocation5 [shape = 's32[2]{0}', space=sflag, size = 0x8, scoped, tag = 'scoped memory for tpu_custom_call.1']
    #allocation6 [shape = 's32[2]{0}', space=sflag, size = 0x8, scoped, tag = 'scoped memory for tpu_custom_call.1']
    #allocation7 [shape = 'u8[4096]{0}', space=vmem, size = 0x1000, scoped, tag = 'input window, operand 2']
    #allocation8 [shape = 's32[2]{0}', space=sflag, size = 0x8, scoped, tag = 'scoped memory for tpu_custom_call.1']
    #allocation9 [shape = 'u8[16384]{0}', space=vmem, size = 0x4000, scoped, tag = 'output window, operand 0']
    %15 = vsyncpa [#allocation5], 0
    %s16 = scalar_lea.sflag [#allocation5], 1
    %17 = vsyncpa %s16, 0
    %18 = vsyncpa [#allocation8], 0
    %s19 = scalar_lea.sflag [#allocation8], 1
    %20 = vsyncpa %s19, 0
    %21 = vsyncpa [#allocation6], 0
    %s22 = scalar_lea.sflag [#allocation6], 1
    %23 = vsyncpa %s22, 0
    loop: start=0, step=1, limit=4
    $region2: #{tpu_custom_call.1} parent=1 // loop_pre_header
      _
    $region3: #{tpu_custom_call.1} parent=1 // loop_header
      %s25 = sphi 0, %s29
      %p26 = scmp.ge.s32.totalorder %s25, 4
      %s32 = sphi 0, %s44
      %s33 = sphi 0, %s40
      %s34 = sphi 0, %s32
      %s35 = sphi 0, %s33
      %s36 = sphi 0, %s34
      %s37 = sphi 0, %s35
      %s47 = sphi 0, %s49
      %s50 = sphi 0, %s47
      %s51 = sphi 0, %s50
      %s67 = sphi 0, %s51
      %s75 = sphi 0, %s77
      %s78 = sphi 0, %s75
      %s79 = sphi 0, %s78
      %s95 = sphi 0, %s79
      %s99 = sphi 0, %s99
      %s101 = sphi 0, %s99
      %s102 = sphi 0, %s101
      %s116 = sphi 0, %s102
      %s124 = sphi 0, %s126
      %s127 = sphi 0, %s124
      %s128 = sphi 0, %s127
      %s144 = sphi 0, %s128
      %s152 = sphi 0, %s154
      %s155 = sphi 0, %s152
      %s156 = sphi 0, %s155
      %s172 = sphi 0, %s156
    $region4: #{tpu_custom_call.1} parent=1 // loop_header_branch
      %28 = sbr.rel (%p26) target = $region8
    $region5: #{tpu_custom_call.1} parent=1 // loop_body
      %s30 = ssub.s32 %s25, 1
      %s31 = ssub.s32 %s25, 2
      %s38 = sadd.s32 1, %s33
      %p39 = scmp.ge.s32.totalorder %s38, 1
      %s40 = scalar_select %p39, 0, %s38
      %s41 = sadd.s32 1, %s32
      %s42 = scalar_select %p39, %s41, %s32
      %p43 = scmp.ge.s32.totalorder %s42, 2
      %s44 = scalar_select %p43, 0, %s42
      %s45 = ssub.s32 %s32, %s44
      %p46 = scmp.eq.s32.totalorder %s45, 0
      %s48 = sadd.s32 %s47, 1
      %s49 = scalar_select %p46, %s47, %s48
      %p52 = pneg %p46
      %p53 = scmp.eq.s32.totalorder %s25, 1
      %p54 = por %p52, %p53
      %p55 = scmp.ne.s32.totalorder %s47, %s50
      %p56 = scmp.eq.s32.totalorder %s25, 0
      %p57 = por %p55, %p56
      %p58 = scmp.ne.s32.totalorder %s47, %s50
      %p59 = scmp.eq.s32.totalorder %s30, 1
      %p60 = por %p58, %p59
      %p61 = scmp.ne.s32.totalorder %s50, %s51
      %p62 = scmp.eq.s32.totalorder %s30, 0
      %p63 = por %p61, %p62
      %p64 = scmp.ne.s32.totalorder %s50, %s51
      %p65 = scmp.eq.s32.totalorder %s31, 1
      %p66 = por %p64, %p65
      %p68 = scmp.ne.s32.totalorder %s51, %s67
      %p69 = scmp.eq.s32.totalorder %s31, 0
      %p70 = por %p68, %p69
      %s71 = ssub.s32 %s32, %s44
      %s72 = ssub.s32 %s33, %s40
      %s73 = sor.u32 %s71, %s72
      %p74 = scmp.eq.s32.totalorder %s73, 0
      %s76 = sadd.s32 %s75, 1
      %s77 = scalar_select %p74, %s75, %s76
      %p80 = pneg %p74
      %p81 = scmp.eq.s32.totalorder %s25, 1
      %p82 = por %p80, %p81
      %p83 = scmp.ne.s32.totalorder %s75, %s78
      %p84 = scmp.eq.s32.totalorder %s25, 0
      %p85 = por %p83, %p84
      %p86 = scmp.ne.s32.totalorder %s75, %s78
      %p87 = scmp.eq.s32.totalorder %s30, 1
      %p88 = por %p86, %p87
      %p89 = scmp.ne.s32.totalorder %s78, %s79
      %p90 = scmp.eq.s32.totalorder %s30, 0
      %p91 = por %p89, %p90
      %p92 = scmp.ne.s32.totalorder %s78, %s79
      %p93 = scmp.eq.s32.totalorder %s31, 1
      %p94 = por %p92, %p93
      %p96 = scmp.ne.s32.totalorder %s79, %s95
      %p97 = scmp.eq.s32.totalorder %s31, 0
      %p98 = por %p96, %p97
      %s100 = sadd.s32 %s99, 1
      %p103 = scmp.eq.s32.totalorder %s25, 1
      %p104 = scmp.ne.s32.totalorder %s99, %s101
      %p105 = scmp.eq.s32.totalorder %s25, 0
      %p106 = por %p104, %p105
      %p107 = scmp.ne.s32.totalorder %s99, %s101
      %p108 = scmp.eq.s32.totalorder %s30, 1
      %p109 = por %p107, %p108
      %p110 = scmp.ne.s32.totalorder %s101, %s102
      %p111 = scmp.eq.s32.totalorder %s30, 0
      %p112 = por %p110, %p111
      %p113 = scmp.ne.s32.totalorder %s101, %s102
      %p114 = scmp.eq.s32.totalorder %s31, 1
      %p115 = por %p113, %p114
      %p117 = scmp.ne.s32.totalorder %s102, %s116
      %p118 = scmp.eq.s32.totalorder %s31, 0
      %p119 = por %p117, %p118
      %s120 = ssub.s32 %s32, %s44
      %s121 = ssub.s32 %s33, %s40
      %s122 = sor.u32 %s120, %s121
      %p123 = scmp.eq.s32.totalorder %s122, 0
      %s125 = sadd.s32 %s124, 1
      %s126 = scalar_select %p123, %s124, %s125
      %p129 = pneg %p123
      %p130 = scmp.eq.s32.totalorder %s25, 1
      %p131 = por %p129, %p130
      %p132 = scmp.ne.s32.totalorder %s124, %s127
      %p133 = scmp.eq.s32.totalorder %s25, 0
      %p134 = por %p132, %p133
      %p135 = scmp.ne.s32.totalorder %s124, %s127
      %p136 = scmp.eq.s32.totalorder %s30, 1
      %p137 = por %p135, %p136
      %p138 = scmp.ne.s32.totalorder %s127, %s128
      %p139 = scmp.eq.s32.totalorder %s30, 0
      %p140 = por %p138, %p139
      %p141 = scmp.ne.s32.totalorder %s127, %s128
      %p142 = scmp.eq.s32.totalorder %s31, 1
      %p143 = por %p141, %p142
      %p145 = scmp.ne.s32.totalorder %s128, %s144
      %p146 = scmp.eq.s32.totalorder %s31, 0
      %p147 = por %p145, %p146
      %s148 = ssub.s32 %s32, %s44
      %s149 = ssub.s32 %s33, %s40
      %s150 = sor.u32 %s148, %s149
      %p151 = scmp.eq.s32.totalorder %s150, 0
      %s153 = sadd.s32 %s152, 1
      %s154 = scalar_select %p151, %s152, %s153
      %p157 = pneg %p151
      %p158 = scmp.eq.s32.totalorder %s25, 1
      %p159 = por %p157, %p158
      %p160 = scmp.ne.s32.totalorder %s152, %s155
      %p161 = scmp.eq.s32.totalorder %s25, 0
      %p162 = por %p160, %p161
      %p163 = scmp.ne.s32.totalorder %s152, %s155
      %p164 = scmp.eq.s32.totalorder %s30, 1
      %p165 = por %p163, %p164
      %p166 = scmp.ne.s32.totalorder %s155, %s156
      %p167 = scmp.eq.s32.totalorder %s30, 0
      %p168 = por %p166, %p167
      %p169 = scmp.ne.s32.totalorder %s155, %s156
      %p170 = scmp.eq.s32.totalorder %s31, 1
      %p171 = por %p169, %p170
      %p173 = scmp.ne.s32.totalorder %s156, %s172
      %p174 = scmp.eq.s32.totalorder %s31, 0
      %p175 = por %p173, %p174
      %p176 = scmp.le.s32.totalorder 1, %s25
      %p177 = scmp.lt.s32.totalorder %s25, 3
      %p178 = pnand %p176, %p177
      %p179 = pneg %p178
      // Predicated region
      $region9: #{tpu_custom_call.1} parent=5 // pred_check
        _
      $region10: #{tpu_custom_call.1} parent=5 // pred_check_branch
        %181 = sbr.rel (%p178) target = $region12
      $region11: #{tpu_custom_call.1} parent=5 // pred_region
        %s182 = ssub.s32 %s25, 1
        // Predicated region
        $region13: #{tpu_custom_call.1} parent=11 // pred_check
          %p183 = pneg %p112
        $region14: #{tpu_custom_call.1} parent=11 // pred_check_branch
          %185 = sbr.rel (%p183) target = $region16
        $region15: #{tpu_custom_call.1} parent=11 // pred_region
          _
        $region16: #{tpu_custom_call.1} parent=11 // pred_fallthru
          _
      $region12: #{tpu_custom_call.1} parent=5 // pred_fallthru
        _
      %p186 = scmp.lt.s32.totalorder %s25, 2
      // Predicated region
      $region17: #{tpu_custom_call.1} parent=5 // pred_check
        %p187 = pneg %p186
      $region18: #{tpu_custom_call.1} parent=5 // pred_check_branch
        %189 = sbr.rel (%p187) target = $region20
      $region19: #{tpu_custom_call.1} parent=5 // pred_region
        // Predicated region
        $region21: #{tpu_custom_call.1} parent=19 // pred_check
          %p190 = pneg %p57
        $region22: #{tpu_custom_call.1} parent=19 // pred_check_branch
          %192 = sbr.rel (%p190) target = $region24
        $region23: #{tpu_custom_call.1} parent=19 // pred_region
          %s193 = sand.u32 %s47, 1
          %s194 = scalar_lea.sflag [#allocation5], %s193
          %s195 = sand.u32 %s47, 1
          %s196 = smul.addr %s195, 16
          %s197 = scalar_lea.vmem [#allocation4], %s196
          %s199 = ssub.s32 256, 256
          %200 = vsyncadd %s194, %s199
          %s201 = smul.addr %s32, 2
          %s202 = smul.addr %s201, 128
          %s203 = scalar_lea.hbm %s1, %s202
          %s204 = sshll.u32 %s197, 4
          %s205 = int_to_ptr.vmem [resolvable:$true] %s204
          %210 = dma.hbm_to_vmem [thread:$0]  %s203, 256, %s205, %s194, 128, 128, 8
        $region24: #{tpu_custom_call.1} parent=19 // pred_fallthru
          _
        // Predicated region
        $region25: #{tpu_custom_call.1} parent=19 // pred_check
          %p211 = pneg %p85
        $region26: #{tpu_custom_call.1} parent=19 // pred_check_branch
          %213 = sbr.rel (%p211) target = $region28
        $region27: #{tpu_custom_call.1} parent=19 // pred_region
          %s214 = sand.u32 %s75, 1
          %s215 = scalar_lea.sflag [#allocation8], %s214
          %s216 = sand.u32 %s75, 1
          %s217 = smul.addr %s216, 4
          %s218 = scalar_lea.vmem [#allocation7], %s217
          %s219 = smul.u32 2, %s33
          %s221 = ssub.s32 64, 64
          %222 = vsyncadd %s215, %s221
          %s223 = smul.addr %s32, 2
          %s224 = sadd.s32 %s219, %s223
          %s225 = smul.addr %s224, 32
          %s226 = scalar_lea.hbm %s2, %s225
          %s227 = sshll.u32 %s218, 4
          %s228 = int_to_ptr.vmem [resolvable:$true] %s227
          %233 = dma.hbm_to_vmem [thread:$0]  %s226, 64, %s228, %s215, 32, 32, 2
        $region28: #{tpu_custom_call.1} parent=19 // pred_fallthru
          _
      $region20: #{tpu_custom_call.1} parent=5 // pred_fallthru
        _
      %p234 = scmp.le.s32.totalorder 1, %s25
      %p235 = scmp.lt.s32.totalorder %s25, 3
      %p236 = pnand %p234, %p235
      %p237 = pneg %p236
      // Predicated region
      $region29: #{tpu_custom_call.1} parent=5 // pred_check
        _
      $region30: #{tpu_custom_call.1} parent=5 // pred_check_branch
        %239 = sbr.rel (%p236) target = $region32
      $region31: #{tpu_custom_call.1} parent=5 // pred_region
        %s240 = ssub.s32 %s25, 1
        %s241 = sand.u32 %s50, 1
        %s242 = scalar_lea.sflag [#allocation5], %s241
        %s243 = sand.u32 %s50, 1
        %s244 = smul.addr %s243, 16
        %s245 = scalar_lea.vmem [#allocation4], %s244
        // Predicated region
        $region33: #{tpu_custom_call.1} parent=31 // pred_check
          %p246 = pneg %p63
        $region34: #{tpu_custom_call.1} parent=31 // pred_check_branch
          %248 = sbr.rel (%p246) target = $region36
        $region35: #{tpu_custom_call.1} parent=31 // pred_region
          %249 = dma.done %s242, 256
        $region36: #{tpu_custom_call.1} parent=31 // pred_fallthru
          _
        %s250 = sand.u32 %s78, 1
        %s251 = scalar_lea.sflag [#allocation8], %s250
        %s252 = sand.u32 %s78, 1
        %s253 = smul.addr %s252, 4
        %s254 = scalar_lea.vmem [#allocation7], %s253
        // Predicated region
        $region37: #{tpu_custom_call.1} parent=31 // pred_check
          %p255 = pneg %p91
        $region38: #{tpu_custom_call.1} parent=31 // pred_check_branch
          %257 = sbr.rel (%p255) target = $region40
        $region39: #{tpu_custom_call.1} parent=31 // pred_region
          %258 = dma.done %s251, 64
        $region40: #{tpu_custom_call.1} parent=31 // pred_fallthru
          _
        %s259 = sand.u32 %s50, 1
        %s260 = scalar_lea.sflag [#allocation5], %s259
        %s261 = sand.u32 %s50, 1
        %s262 = smul.addr %s261, 16
        %s263 = scalar_lea.vmem [#allocation4], %s262
        %p264 = pneg %p63
        %p265 = pneg %p60
        %s266 = sand.u32 %s78, 1
        %s267 = scalar_lea.sflag [#allocation8], %s266
        %s268 = sand.u32 %s78, 1
        %s269 = smul.addr %s268, 4
        %s270 = scalar_lea.vmem [#allocation7], %s269
        %p271 = pneg %p91
        %p272 = pneg %p88
        %p273 = pneg %p112
        %p274 = pneg %p109
        %p275 = pneg %p140
        %p276 = pneg %p137
        %s277 = sand.u32 %s127, 1
        %s278 = scalar_lea.sflag [#allocation6], %s277
        %s279 = sand.u32 %s127, 1
        %s280 = smul.addr %s279, 16
        %s281 = scalar_lea.vmem [#allocation9], %s280
        %p282 = pneg %p168
        %p283 = pneg %p165
        %s284 = smul.u32 2, %s35
        %p285 = scmp.lt.s32.totalorder %s34, 1
        %s286 = scalar_select %p285, %s34, 1
        %p287 = scmp.lt.s32.totalorder %s284, 1
        %s288 = scalar_select %p287, %s284, 1
        %s289 = smul.addr %s286, 2
        %s290 = sadd.s32 %s288, %s289
        %s291 = smul.addr %s290, 8
        %s292 = scalar_lea.vmem %s5, %s291
        %s293 = smul.u32 2, %s35
        %s294 = smul.u32 2, %s35
        %s295 = smul.u32 2, %s35
        %p296 = scmp.lt.s32.totalorder %s34, 1
        %s297 = scalar_select %p296, %s34, 1
        %p298 = scmp.lt.s32.totalorder %s295, 1
        %s299 = scalar_select %p298, %s295, 1
        %s300 = smul.addr %s297, 2
        %s301 = sadd.s32 %s299, %s300
        %s302 = smul.addr %s301, 8
        %s303 = scalar_lea.vmem %s5, %s302
        %s304 = smul.u32 2, %s35
        %v307 = vld [vmem:[%s245] sm:$0xff]
        %v308 = vld [vmem:[%s245 + $0x8] sm:$0xff]
        %v309 = vmul.f32 %v307, %v307
        %v310 = vmul.f32 %v308, %v308
        %vm311 = vcmask 261120
        %v312 = vsel %vm311, %v309, 0.0
        %313 = vadd.xlane.f32.xlu0 %v312
        %v314 = vpop.xlane.xlu0 %313
        %v315 = vsel %vm311, %v310, 0.0
        %316 = vadd.xlane.f32.xlu0 %v315
        %v317 = vpop.xlane.xlu0 %316
        %v318 = vrsqrt.pop %v314
        %v319 = vrsqrt.pop %v317
        %v320 = vmul.f32 %v307, %v318
        %v321 = vmul.f32 %v308, %v319
        %v322 = vpack.c.bf16 %v321, %v320
        %v325 = vsel %vm311, %v322, 1065369472
        %v327 = vld [vmem:[%s254] sm:$0x3]
        %v328 = vld [vmem:[%s254 + $0x2] sm:$0x3]
        %v329 = vunpack.c.l.s8.bf16 %v327
        %v330 = vunpack.c.l.s8.bf16 %v328
        %v333 = vunpack.c.l.b16 %v329
        %v334 = vunpack.c.l.b16 %v330
        %v335 = vpack.c.b16 %v334, %v333
        %vm336 = vcmask 130048
        %v338 = vsel %vm336, %v335, 0
        %340 = vmatprep.subr.bf16.mxu0 0
        %341 = vmatpush1.bf16.msra.mxu0 %v325
        %342 = vmatprep.subr.bf16.mxu0 0
        %343 = vmatpush1.bf16.msra.mxu0 0
        %344 = vmatprep.subr.bf16.mxu0 0
        %345 = vmatpush1.bf16.msra.mxu0 0
        %346 = vmatprep.subr.bf16.mxu0 0
        %347 = vmatpush1.bf16.msra.mxu0 0
        %348 = vmatprep.subr.bf16.mxu0 0
        %349 = vmatpush1.bf16.msra.mxu0 0
        %350 = vmatprep.subr.bf16.mxu0 0
        %351 = vmatpush1.bf16.msra.mxu0 0
        %352 = vmatprep.subr.bf16.mxu0 0
        %353 = vmatpush1.bf16.msra.mxu0 0
        %354 = vmatprep.subr.bf16.mxu0 0
        %355 = vmatpush1.bf16.msra.mxu0 0
        %356 = vmatprep.subr.bf16.mxu0 0
        %357 = vmatpush1.bf16.msra.mxu0 0
        %358 = vmatprep.subr.bf16.mxu0 0
        %359 = vmatpush1.bf16.msra.mxu0 0
        %360 = vmatprep.subr.bf16.mxu0 0
        %361 = vmatpush1.bf16.msra.mxu0 0
        %362 = vmatprep.subr.bf16.mxu0 0
        %363 = vmatpush1.bf16.msra.mxu0 0
        %364 = vmatprep.subr.bf16.mxu0 0
        %365 = vmatpush1.bf16.msra.mxu0 0
        %366 = vmatprep.subr.bf16.mxu0 0
        %367 = vmatpush1.bf16.msra.mxu0 0
        %368 = vmatprep.subr.bf16.mxu0 0
        %369 = vmatpush1.bf16.msra.mxu0 0
        %370 = vmatprep.subr.bf16.mxu0 0
        %371 = vmatpush1.bf16.msra.mxu0 0
        %372 = vmatprep.mubr.bf16.mxu0 0
        %373 = vmatmul.mubr.bf16.gmra.mrb[0].mxu0 %v338
        %v374 = vpop.f32.mrb[0].mxu0
        %v375 = vadd.f32 0.0, %v374
        %v376 = vpop.f32.mrb[0].mxu0
        %v377 = vpop.f32.mrb[0].mxu0
        %v378 = vadd.f32 0.0, %v377
        %v379 = vpop.f32.mrb[0].mxu0
        %380 = vdwg.mxu0
        %s381 = smul.u32 %s35, 16
        %s382 = scalar_lea.vmem %s245, %s381 [#allocation4]
        %v383 = vld [vmem:[%s382] sm:$0xff]
        %v384 = vld [vmem:[%s382 + $0x8] sm:$0xff]
        %v385 = vmul.f32 %v383, %v383
        %v386 = vmul.f32 %v384, %v384
        %v387 = vsel %vm311, %v385, 0.0
        %388 = vadd.xlane.f32.xlu0 %v387
        %v389 = vpop.xlane.xlu0 %388
        %v390 = vsel %vm311, %v386, 0.0
        %391 = vadd.xlane.f32.xlu0 %v390
        %v392 = vpop.xlane.xlu0 %391
        %v393 = vrsqrt.pop %v389
        %v394 = vrsqrt.pop %v392
        %v395 = vmul.f32 %v383, %v393
        %v396 = vmul.f32 %v384, %v394
        %v397 = vmul.f32 %v395, %v375
        %v398 = vmul.f32 %v396, %v378
        %v399 = vsel %vm311, %v397, 0.0
        %400 = vadd.xlane.f32.xlu0 %v399
        %v401 = vpop.xlane.xlu0 %400
        %v402 = vsel %vm311, %v398, 0.0
        %403 = vadd.xlane.f32.xlu0 %v402
        %v404 = vpop.xlane.xlu0 %403
        %v405 = vrcp.pop %v375
        %v406 = vmul.f32 %v401, %v405
        %v407 = vrcp.pop %v378
        %v408 = vmul.f32 %v404, %v407
        %vm409 = vcmp.le.f32.partialorder %v406, 0.3
        %vm410 = vcmp.le.f32.partialorder %v408, 0.3
        %v411 = vsel %vm409, 1, 0
        %v412 = vsel %vm410, 1, 0
        %v413 = vcvt.s32.f32 %v411
        %v414 = vcvt.s32.f32 %v412
        %vm415 = vcmp.le.f32.partialorder %v375, 2.0
        %vm416 = vcmp.le.f32.partialorder %v378, 2.0
        %v417 = vsel %vm415, 1, 0
        %v418 = vsel %vm416, 1, 0
        %v419 = vcvt.s32.f32 %v417
        %v420 = vcvt.s32.f32 %v418
        %v421 = vmax.f32 %v413, %v419
        %v422 = vmax.f32 %v414, %v420
        %v423 = vsub.f32 1.0, %v421
        %v424 = vsub.f32 1.0, %v422
        %v425 = vld [vmem:[%s3] sm:$0x7]
        %427 = vset.pattern.permute.xlu0 32
        %428 = vperm.xlu0 %427, %v413
        %v429 = vpop.permute.xlu0 %428
        %432 = vset.pattern.permute.xlu0 32
        %433 = vperm.xlu0 %432, %v414
        %v434 = vpop.permute.xlu0 %433
        %v436 = vlaneseq
        %v437 = vshrl.u32 %v436, 7
        %v438 = vsub.s32 0, %v437
        %v439 = vrot.slane %v425, %v438
        %v440 = vmul.f32 %v429, %v439
        %v441 = vmul.f32 %v434, %v439
        %443 = vset.pattern.permute.xlu0 32
        %444 = vperm.xlu0 %443, %v419
        %v445 = vpop.permute.xlu0 %444
        %448 = vset.pattern.permute.xlu0 32
        %449 = vperm.xlu0 %448, %v420
        %v450 = vpop.permute.xlu0 %449
        %v452 = vlaneseq
        %v453 = vshrl.u32 %v452, 7
        %v454 = vsub.s32 1, %v453
        %v455 = vrot.slane %v425, %v454
        %v456 = vmul.f32 %v445, %v455
        %v457 = vmul.f32 %v450, %v455
        %v458 = vadd.f32 %v440, %v456
        %v459 = vadd.f32 %v441, %v457
        %461 = vset.pattern.permute.xlu0 32
        %462 = vperm.xlu0 %461, %v423
        %v463 = vpop.permute.xlu0 %462
        %466 = vset.pattern.permute.xlu0 32
        %467 = vperm.xlu0 %466, %v424
        %v468 = vpop.permute.xlu0 %467
        %v470 = vlaneseq
        %v471 = vshrl.u32 %v470, 7
        %v472 = vsub.s32 2, %v471
        %v473 = vrot.slane %v425, %v472
        %v474 = vmul.f32 %v463, %v473
        %v475 = vmul.f32 %v468, %v473
        %v476 = vadd.f32 %v458, %v474
        %v477 = vadd.f32 %v459, %v475
        %s478 = sld [smem:[#allocation3]]
        %s479 = scvt.s32.f32 %s478
        %s480 = sld [smem:[#allocation3 + $0x1]]
        %s481 = scvt.s32.f32 %s480
        %s482 = sld [smem:[#allocation3 + $0x2]]
        %s483 = scvt.s32.f32 %s482
        %v484 = vstv %s479
        %v485 = vmul.f32 %v413, %v484
        %v486 = vmul.f32 %v414, %v484
        %v487 = vstv %s481
        %v488 = vmul.f32 %v419, %v487
        %v489 = vmul.f32 %v420, %v487
        %v490 = vadd.f32 %v485, %v488
        %v491 = vadd.f32 %v486, %v489
        %v492 = vstv %s483
        %v493 = vmul.f32 %v423, %v492
        %v494 = vmul.f32 %v424, %v492
        %v495 = vadd.f32 %v490, %v493
        %v496 = vadd.f32 %v491, %v494
        %v497 = vmax.f32 %v495, 1.0
        %v498 = vmax.f32 %v496, 1.0
        %v499 = vrcp.pop %v497
        %v500 = vmul.f32 1.0, %v499
        %v501 = vrcp.pop %v498
        %v502 = vmul.f32 1.0, %v501
        %vm503 = vcmp.ne.f32.partialorder %v495, 0.0
        %vm504 = vcmp.ne.f32.partialorder %v496, 0.0
        %v505 = vsel %vm503, 1, 0
        %v506 = vsel %vm504, 1, 0
        %507 = vset.pattern.permute.xlu0 32
        %508 = vperm.xlu0 %507, %v505
        %v509 = vpop.permute.xlu0 %508
        %510 = vset.pattern.permute.xlu0 32
        %511 = vperm.xlu0 %510, %v506
        %v512 = vpop.permute.xlu0 %511
        %vm513 = vcmp.eq.s32.totalorder %v509, 1
        %vm514 = vcmp.eq.s32.totalorder %v512, 1
        %v515 = vsel %vm513, %v476, 0.0
        %v516 = vsel %vm514, %v477, 0.0
        %518 = vset.pattern.permute.xlu0 32
        %519 = vperm.xlu0 %518, %v500
        %v520 = vpop.permute.xlu0 %519
        %523 = vset.pattern.permute.xlu0 32
        %524 = vperm.xlu0 %523, %v502
        %v525 = vpop.permute.xlu0 %524
        %v527 = vmul.f32 %v515, %v520
        %v528 = vmul.f32 %v516, %v525
        %v529 = vadd.f32 %v383, %v527
        %v530 = vadd.f32 %v384, %v528
        %531 = vst.msk [vmem:[%s281] sm:$0xff] %vm311, %v529
        %532 = vst.msk [vmem:[%s281 + $0x8] sm:$0xff] %vm311, %v530
        %v533 = vmul.f32 %v529, %v529
        %v534 = vmul.f32 %v530, %v530
        %v535 = vsel %vm311, %v533, 0.0
        %536 = vadd.xlane.f32.xlu0 %v535
        %v537 = vpop.xlane.xlu0 %536
        %v538 = vsel %vm311, %v534, 0.0
        %539 = vadd.xlane.f32.xlu0 %v538
        %v540 = vpop.xlane.xlu0 %539
        %v541 = vmax.f32 %v537, 1e-16
        %v542 = vmax.f32 %v540, 1e-16
        %v543 = vrsqrt.pop %v541
        %v544 = vrsqrt.pop %v542
        %547 = vrot.lane.b32.xlu0 %v406, 96
        %v548 = vpop.permute.xlu0 %547
        %549 = vrot.lane.b32.xlu0 %v408, 96
        %v550 = vpop.permute.xlu0 %549
        %vm553 = vcmask 7168
        %554 = vst.msk [vmem:[%s303] sm:$0xff] %vm553, %v548
        %555 = vst.msk [vmem:[%s303 + $0x8] sm:$0xff] %vm553, %v550
        %558 = vrot.lane.b32.xlu0 %v375, 97
        %v559 = vpop.permute.xlu0 %558
        %560 = vrot.lane.b32.xlu0 %v378, 97
        %v561 = vpop.permute.xlu0 %560
        %vm564 = vcmask 15368
        %565 = vst.msk [vmem:[%s303] sm:$0xff] %vm564, %v559
        %566 = vst.msk [vmem:[%s303 + $0x8] sm:$0xff] %vm564, %v561
        %vm567 = vcmask 23568
        %568 = vst.msk [vmem:[%s303] sm:$0xff] %vm567, %v543
        %569 = vst.msk [vmem:[%s303 + $0x8] sm:$0xff] %vm567, %v544
        %s570 = sand.u32 %s127, 1
        %s571 = scalar_lea.sflag [#allocation6], %s570
        %s572 = sand.u32 %s127, 1
        %s573 = smul.addr %s572, 16
        %s574 = scalar_lea.vmem [#allocation9], %s573
        %s575 = smul.u32 2, %s35
        %p576 = scmp.lt.s32.totalorder %s34, 1
        %s577 = scalar_select %p576, %s34, 1
        %p578 = scmp.lt.s32.totalorder %s575, 1
        %s579 = scalar_select %p578, %s575, 1
        %s580 = smul.addr %s577, 2
        %s581 = sadd.s32 %s579, %s580
        %s582 = smul.addr %s581, 8
        %s583 = scalar_lea.vmem %s5, %s582
        // Predicated region
        $region41: #{tpu_custom_call.1} parent=31 // pred_check
          %p584 = pneg %p137
        $region42: #{tpu_custom_call.1} parent=31 // pred_check_branch
          %586 = sbr.rel (%p584) target = $region44
        $region43: #{tpu_custom_call.1} parent=31 // pred_region
          %s587 = smul.u32 2, %s35
          %s589 = ssub.s32 256, 256
          %590 = vsyncadd %s571, %s589
          %s591 = smul.addr %s34, 2
          %s592 = sadd.s32 %s587, %s591
          %s593 = smul.addr %s592, 128
          %s594 = scalar_lea.hbm %s4, %s593
          %s595 = sshll.u32 %s574, 4
          %s596 = int_to_ptr.vmem [resolvable:$true] %s595
          %601 = dma.vmem_to_hbm [thread:$0]  %s596, 256, %s594, %s571, 128, 128, 8
        $region44: #{tpu_custom_call.1} parent=31 // pred_fallthru
          _
        // Predicated region
        $region45: #{tpu_custom_call.1} parent=31 // pred_check
          %p602 = pneg %p165
        $region46: #{tpu_custom_call.1} parent=31 // pred_check_branch
          %604 = sbr.rel (%p602) target = $region48
        $region47: #{tpu_custom_call.1} parent=31 // pred_region
          %s605 = smul.u32 2, %s35
        $region48: #{tpu_custom_call.1} parent=31 // pred_fallthru
          _
      $region32: #{tpu_custom_call.1} parent=5 // pred_fallthru
        _
      %p606 = scmp.le.s32.totalorder 2, %s25
      // Predicated region
      $region49: #{tpu_custom_call.1} parent=5 // pred_check
        %p607 = pneg %p606
      $region50: #{tpu_custom_call.1} parent=5 // pred_check_branch
        %609 = sbr.rel (%p607) target = $region52
      $region51: #{tpu_custom_call.1} parent=5 // pred_region
        %s610 = ssub.s32 %s25, 2
        // Predicated region
        $region53: #{tpu_custom_call.1} parent=51 // pred_check
          %p611 = pneg %p143
        $region54: #{tpu_custom_call.1} parent=51 // pred_check_branch
          %613 = sbr.rel (%p611) target = $region56
        $region55: #{tpu_custom_call.1} parent=51 // pred_region
          %s614 = sand.u32 %s128, 1
          %s615 = scalar_lea.sflag [#allocation6], %s614
          %s616 = sand.u32 %s128, 1
          %s617 = smul.addr %s616, 16
          %s618 = scalar_lea.vmem [#allocation9], %s617
          %619 = dma.done %s615, 256
        $region56: #{tpu_custom_call.1} parent=51 // pred_fallthru
          _
        // Predicated region
        $region57: #{tpu_custom_call.1} parent=51 // pred_check
          %p620 = pneg %p171
        $region58: #{tpu_custom_call.1} parent=51 // pred_check_branch
          %622 = sbr.rel (%p620) target = $region60
        $region59: #{tpu_custom_call.1} parent=51 // pred_region
          %s623 = smul.u32 2, %s37
          %p624 = scmp.lt.s32.totalorder %s36, 1
          %s625 = scalar_select %p624, %s36, 1
          %p626 = scmp.lt.s32.totalorder %s623, 1
          %s627 = scalar_select %p626, %s623, 1
          %s628 = smul.addr %s625, 2
          %s629 = sadd.s32 %s627, %s628
          %s630 = smul.addr %s629, 8
          %s631 = scalar_lea.vmem %s5, %s630
        $region60: #{tpu_custom_call.1} parent=51 // pred_fallthru
          _
      $region52: #{tpu_custom_call.1} parent=5 // pred_fallthru
        _
    $region6: #{tpu_custom_call.1} parent=1 // loop_footer
      %s29 = sadd.s32 1, %s25
    $region7: #{tpu_custom_call.1} parent=1 // loop_footer_branch
      %24 = sbr.rel target = $region3
    $region8: #{tpu_custom_call.1} parent=1 // loop_exit
      _
    %632 = vsyncpa [#allocation5], 1
    %s633 = scalar_lea.sflag [#allocation5], 1
    %634 = vsyncpa %s633, 1
    %635 = vsyncpa [#allocation8], 1
    %s636 = scalar_lea.sflag [#allocation8], 1
    %637 = vsyncpa %s636, 1
    %638 = vsyncpa [#allocation6], 1
    %s639 = scalar_lea.sflag [#allocation6], 1
    %640 = vsyncpa %s639, 1

</llo_original>
